<compile_context>
chip_gen: v7x
topology: tpu7x:2x2x1
jax: 0.10.0
libtpu: 0.0.40
codegen_flags: <defaults>
</compile_context>

<pallas_src>
import functools
import math

import jax
import jax.numpy as jnp
from jax.experimental import pallas as pl
from jax.experimental.pallas import tpu as pltpu

_LANES = 512                     # slab width for the generic (flattened) path
_TARGET_TILE_BYTES = 1 << 20     # ~1 MiB per block


def _fermi_dirac_kernel(x_ref, o_ref, *, r, inv_t):
    # probs = 1 / (exp((dist - r) / t) + 1), computed in f32 regardless of the
    # storage dtype (casts stay in-register).
    x = x_ref[...].astype(jnp.float32)
    z = (x - r) * inv_t                      # VPU
    e = jnp.exp(z)                           # EUP (separate issue slot)
    o_ref[...] = (1.0 / (e + 1.0)).astype(o_ref.dtype)


def _launch(x2, r, t, row_block):
    rows, cols = x2.shape
    grid = (pl.cdiv(rows, row_block),)       # partial last block handled by Mosaic
    return pl.pallas_call(
        functools.partial(_fermi_dirac_kernel, r=float(r), inv_t=1.0 / float(t)),
        out_shape=jax.ShapeDtypeStruct((rows, cols), x2.dtype),
        grid=grid,
        in_specs=[pl.BlockSpec((row_block, cols), lambda i: (i, 0))],
        out_specs=pl.BlockSpec((row_block, cols), lambda i: (i, 0)),
        compiler_params=pltpu.CompilerParams(
            dimension_semantics=("parallel",),
        ),
    )(x2)


def _pick_row_block(rows, cols, itemsize):
    rb = _TARGET_TILE_BYTES // (cols * itemsize)
    rb = max(8, (rb // 8) * 8)                       # multiple of 8 sublanes
    rb = min(rb, 1024)
    rb = min(rb, max(8, ((rows + 7) // 8) * 8))      # don't over-allocate tiny inputs
    return rb


def fermi_dirac_decoder(dist, r, t):
    """probs = 1 / (exp((dist - r) / t) + 1), elementwise, any input shape."""
    orig_shape = dist.shape
    if dist.size == 0:
        return dist
    if not jnp.issubdtype(dist.dtype, jnp.floating):
        dist = dist.astype(jnp.float32)
    itemsize = jnp.dtype(dist.dtype).itemsize

    # --- Fast path: >=2-D, lane-aligned trailing dim -> zero-copy wrapper.
    if dist.ndim >= 2 and dist.shape[-1] % 128 == 0:
        cols = dist.shape[-1]
        rows = math.prod(dist.shape[:-1])
        if 8 * cols * itemsize <= 2 * _TARGET_TILE_BYTES:
            rb = _pick_row_block(rows, cols, itemsize)
            out = _launch(dist.reshape(rows, cols), r, t, rb)
            return out.reshape(orig_shape)

    # --- Generic path: flatten into a lane-dense (rows, _LANES) slab; only the
    # trailing partial row is padded.
    x = jnp.ravel(dist)
    n = x.shape[0]
    rows = max(int(pl.cdiv(n, _LANES)), 1)
    total = rows * _LANES
    if total != n:
        x = jnp.pad(x, (0, total - n))
    x2 = x.reshape(rows, _LANES)

    rb = _pick_row_block(rows, _LANES, itemsize)
    out = _launch(x2, r, t, rb)
    return out.reshape(-1)[:n].reshape(orig_shape)


def _reference(dist, r, t):
    return 1.0 / (jnp.exp((dist - r) / t) + 1.0)


if __name__ == "__main__":
    R, T = 2.0, 1.0
    key = jax.random.PRNGKey(0)
    k1, k2, k3 = jax.random.split(key, 3)

    # Small per-edge distance matrix (generic flatten path, single block).
    dist_edges = jax.random.uniform(k1, (8, 32), jnp.float32, minval=0.0, maxval=5.0)
    probs = jax.block_until_ready(fermi_dirac_decoder(dist_edges, R, T))
    assert probs.shape == dist_edges.shape
    assert bool(jnp.all(jnp.isfinite(probs)))
    assert bool(jnp.allclose(probs, _reference(dist_edges, R, T), rtol=1e-6, atol=1e-6))

    # Lane-aligned 2-D input: zero-copy fast path, multi-block grid with a
    # partial trailing block (300 rows, 256-row blocks).
    dist_mat = jax.random.uniform(k2, (300, 1024), jnp.float32, minval=0.0, maxval=10.0)
    probs2 = jax.block_until_ready(fermi_dirac_decoder(dist_mat, R, T))
    assert probs2.shape == dist_mat.shape
    assert bool(jnp.all(jnp.isfinite(probs2)))
    assert bool(jnp.allclose(probs2, _reference(dist_mat, R, T), rtol=1e-6, atol=1e-6))

    # 1-D ragged edge list: generic path with a small tail pad.
    dist_1d = jax.random.uniform(k3, (777,), jnp.float32, minval=0.0, maxval=6.0)
    probs3 = jax.block_until_ready(fermi_dirac_decoder(dist_1d, R, T))
    assert probs3.shape == dist_1d.shape
    assert bool(jnp.all(jnp.isfinite(probs3)))
    assert bool(jnp.allclose(probs3, _reference(dist_1d, R, T), rtol=1e-6, atol=1e-6))

    print("KERNEL_OK")
</pallas_src>

<mosaic_0001>
module attributes {stable_mosaic.version = 11 : i64} {
  func.func @_fermi_dirac_kernel(%arg0: i32, %arg1: memref<8x512xf32, #tpu.memory_space<vmem>>, %arg2: memref<8x512xf32, #tpu.memory_space<vmem>>) attributes {dimension_semantics = [#tpu.dimension_semantics<parallel>], iteration_bounds = array<i64: 1>, scalar_prefetch = 0 : i64, scratch_operands = 0 : i64, tpu.core_type = #tpu.core_type<tc>, window_params = [{transform_indices = @transform_0, window_bounds = array<i64: 8, 512>}, {transform_indices = @transform_1, window_bounds = array<i64: 8, 512>}]} {
    %c0 = arith.constant 0 : index
    %c0_0 = arith.constant 0 : index
    %0 = vector.load %arg1[%c0, %c0_0] : memref<8x512xf32, #tpu.memory_space<vmem>>, vector<8x512xf32>
    %cst = arith.constant 2.000000e+00 : f32
    %1 = vector.broadcast %cst : f32 to vector<8x512xf32>
    %2 = arith.subf %0, %1 : vector<8x512xf32>
    %cst_1 = arith.constant 1.000000e+00 : f32
    %3 = vector.broadcast %cst_1 : f32 to vector<8x512xf32>
    %4 = arith.mulf %2, %3 : vector<8x512xf32>
    %5 = math.exp %4 : vector<8x512xf32>
    %cst_2 = arith.constant 1.000000e+00 : f32
    %6 = vector.broadcast %cst_2 : f32 to vector<8x512xf32>
    %7 = arith.addf %5, %6 : vector<8x512xf32>
    %cst_3 = arith.constant 1.000000e+00 : f32
    %8 = vector.broadcast %cst_3 : f32 to vector<8x512xf32>
    %9 = arith.divf %8, %7 : vector<8x512xf32>
    %c0_4 = arith.constant 0 : index
    %c0_5 = arith.constant 0 : index
    %10 = vector.load %arg2[%c0_4, %c0_5] : memref<8x512xf32, #tpu.memory_space<vmem>>, vector<8x512xf32>
    tpu.vector_store %arg2[%c0_4, %c0_5], %9 {strides = array<i32>} : memref<8x512xf32, #tpu.memory_space<vmem>>, vector<8x512xf32>,
    return
  }
  func.func @transform_0(%arg0: i32) -> (i32, i32) {
    %c0_i32 = arith.constant 0 : i32
    %c0_i32_0 = arith.constant 0 : i32
    return %arg0, %c0_i32 : i32, i32
  }
  func.func @transform_1(%arg0: i32) -> (i32, i32) {
    %c0_i32 = arith.constant 0 : i32
    %c0_i32_0 = arith.constant 0 : i32
    return %arg0, %c0_i32 : i32, i32
  }
}

</mosaic_0001>

<llo_original>
// kernel: tpu_custom_call.1
$region0: #{tpu_custom_call.1}
  #allocation0 [shape = 'u32[]', space=smem, size = 0x4, offset = 0x4, fixed_abs, tag = 'smem constant byte address 0x4 - core index']
  #allocation1 [shape = 'u32[144,128]{1,0:T(1,128)}', space=vmem, size = 0x12000, scoped, tag = 'internal scratch']
  %s0 = inlined_call_operand.hbm [shape: f32[1,512], index: 0, kind: input, shape index: {}]
  %s1 = inlined_call_operand.hbm [shape: f32[1,512], index: 1, kind: output, shape index: {}]
  %s2 = sld [smem:[#allocation0]]
  $region18: #{tpu_custom_call.1} parent=0
    _
  %s4 = ssub.s32 1, %s2
  %s5 = scalar_select 0, %s4, %s2
  $region1: #{tpu_custom_call.1} parent=0
    #allocation2 [shape = 'u8[16384]{0}', space=vmem, size = 0x4000, scoped, tag = 'input window, operand 0, single buffered']
    #allocation3 [shape = 's32[1]{0}', space=sflag, size = 0x4, scoped, tag = 'scoped memory for tpu_custom_call.1']
    #allocation4 [shape = 's32[1]{0}', space=sflag, size = 0x4, scoped, tag = 'scoped memory for tpu_custom_call.1']
    #allocation5 [shape = 'u8[16384]{0}', space=vmem, size = 0x4000, scoped, tag = 'output window, operand 0, single buffered']
    %6 = vsyncpa [#allocation3], 0
    %7 = vsyncpa [#allocation4], 0
    // Predicated region
    $region2: #{tpu_custom_call.1} parent=1 // pred_check
      _
    $region3: #{tpu_custom_call.1} parent=1 // pred_check_branch
      %9 = sbr.rel (0) target = $region5
    $region4: #{tpu_custom_call.1} parent=1 // pred_region
      %s11 = ssub.s32 512, 64
      %12 = vsyncadd [#allocation3], %s11
      %s13 = sshll.u32 [#allocation2], 4
      %s14 = int_to_ptr.vmem [resolvable:$true] %s13
      %19 = dma.hbm_to_vmem [thread:$0]  %s0, 64, %s14, [#allocation3], 64, 64, 4
    $region5: #{tpu_custom_call.1} parent=1 // pred_fallthru
      _
    // Predicated region
    $region6: #{tpu_custom_call.1} parent=1 // pred_check
      _
    $region7: #{tpu_custom_call.1} parent=1 // pred_check_branch
      %21 = sbr.rel (0) target = $region9
    $region8: #{tpu_custom_call.1} parent=1 // pred_region
      %22 = dma.done [#allocation3], 512
    $region9: #{tpu_custom_call.1} parent=1 // pred_fallthru
      _
    %v23 = vld [vmem:[#allocation2] sm:$0xf]
    %v24 = vld [vmem:[#allocation2 + $0x4] sm:$0xf]
    %v25 = vld [vmem:[#allocation2 + $0x8] sm:$0xf]
    %v26 = vld [vmem:[#allocation2 + $0xc] sm:$0xf]
    %v27 = vld [vmem:[#allocation2 + $0x10] sm:$0xf]
    %v28 = vld [vmem:[#allocation2 + $0x14] sm:$0xf]
    %v29 = vld [vmem:[#allocation2 + $0x18] sm:$0xf]
    %v30 = vld [vmem:[#allocation2 + $0x1c] sm:$0xf]
    %v31 = vsub.f32 %v23, 2.0
    %v32 = vsub.f32 %v24, 2.0
    %v33 = vsub.f32 %v25, 2.0
    %v34 = vsub.f32 %v26, 2.0
    %v35 = vsub.f32 %v27, 2.0
    %v36 = vsub.f32 %v28, 2.0
    %v37 = vsub.f32 %v29, 2.0
    %v38 = vsub.f32 %v30, 2.0
    %v39 = vmul.f32 %v31, 1.442695
    %v40 = vpow.pop %v39
    %v41 = vmul.f32 %v32, 1.442695
    %v42 = vpow.pop %v41
    %v43 = vmul.f32 %v33, 1.442695
    %v44 = vpow.pop %v43
    %v45 = vmul.f32 %v34, 1.442695
    %v46 = vpow.pop %v45
    %v47 = vmul.f32 %v35, 1.442695
    %v48 = vpow.pop %v47
    %v49 = vmul.f32 %v36, 1.442695
    %v50 = vpow.pop %v49
    %v51 = vmul.f32 %v37, 1.442695
    %v52 = vpow.pop %v51
    %v53 = vmul.f32 %v38, 1.442695
    %v54 = vpow.pop %v53
    %v55 = vadd.f32 %v40, 1.0
    %v56 = vadd.f32 %v42, 1.0
    %v57 = vadd.f32 %v44, 1.0
    %v58 = vadd.f32 %v46, 1.0
    %v59 = vadd.f32 %v48, 1.0
    %v60 = vadd.f32 %v50, 1.0
    %v61 = vadd.f32 %v52, 1.0
    %v62 = vadd.f32 %v54, 1.0
    %v63 = vrcp.pop %v55
    %v64 = vmul.f32 1.0, %v63
    %v65 = vrcp.pop %v56
    %v66 = vmul.f32 1.0, %v65
    %v67 = vrcp.pop %v57
    %v68 = vmul.f32 1.0, %v67
    %v69 = vrcp.pop %v58
    %v70 = vmul.f32 1.0, %v69
    %v71 = vrcp.pop %v59
    %v72 = vmul.f32 1.0, %v71
    %v73 = vrcp.pop %v60
    %v74 = vmul.f32 1.0, %v73
    %v75 = vrcp.pop %v61
    %v76 = vmul.f32 1.0, %v75
    %v77 = vrcp.pop %v62
    %v78 = vmul.f32 1.0, %v77
    %v79 = vlaneseq
    %vm80 = vcmp.ge.s32.totalorder %v79, 0
    %vm81 = vcmp.lt.s32.totalorder %v79, 512
    %vm82 = vmand %vm80, %vm81
    %83 = vst.msk [vmem:[#allocation5] sm:$0xf] %vm82, %v64
    %84 = vst.msk [vmem:[#allocation5 + $0x4] sm:$0xf] %vm82, %v66
    %85 = vst.msk [vmem:[#allocation5 + $0x8] sm:$0xf] %vm82, %v68
    %86 = vst.msk [vmem:[#allocation5 + $0xc] sm:$0xf] %vm82, %v70
    %87 = vst.msk [vmem:[#allocation5 + $0x10] sm:$0xf] %vm82, %v72
    %88 = vst.msk [vmem:[#allocation5 + $0x14] sm:$0xf] %vm82, %v74
    %89 = vst.msk [vmem:[#allocation5 + $0x18] sm:$0xf] %vm82, %v76
    %90 = vst.msk [vmem:[#allocation5 + $0x1c] sm:$0xf] %vm82, %v78
    // Predicated region
    $region10: #{tpu_custom_call.1} parent=1 // pred_check
      _
    $region11: #{tpu_custom_call.1} parent=1 // pred_check_branch
      %92 = sbr.rel (0) target = $region13
    $region12: #{tpu_custom_call.1} parent=1 // pred_region
      %s94 = ssub.s32 512, 64
      %95 = vsyncadd [#allocation4], %s94
      %s96 = sshll.u32 [#allocation5], 4
      %s97 = int_to_ptr.vmem [resolvable:$true] %s96
      %102 = dma.vmem_to_hbm [thread:$0]  %s97, 64, %s1, [#allocation4], 64, 64, 4
    $region13: #{tpu_custom_call.1} parent=1 // pred_fallthru
      _
    // Predicated region
    $region14: #{tpu_custom_call.1} parent=1 // pred_check
      _
    $region15: #{tpu_custom_call.1} parent=1 // pred_check_branch
      %104 = sbr.rel (0) target = $region17
    $region16: #{tpu_custom_call.1} parent=1 // pred_region
      %105 = dma.done [#allocation4], 512
    $region17: #{tpu_custom_call.1} parent=1 // pred_fallthru
      _
    %106 = vsyncpa [#allocation3], 1
    %107 = vsyncpa [#allocation4], 1

</llo_original>
